<compile_context>
chip_gen: v6e
topology: v6e:2x2x1
jax: 0.10.0
libtpu: 0.0.40
codegen_flags: <defaults>
</compile_context>

<pallas_src>
import functools

import jax
import jax.numpy as jnp
from jax.experimental import pallas as pl
from jax.experimental.pallas import tpu as pltpu


def _identity_method(raw_w):
    # TODO(synk): `method` is abstract (NotImplementedError) in the reference
    # WeightHacker; identity stands in for the concrete reparameterization.
    return raw_w


def _round_up(x, m):
    return (x + m - 1) // m * m


def _tiled_linear_kernel(x_ref, w_ref, b_ref, o_ref, acc_ref):
    """Compute one (tm, tn) output tile, accumulating over the K grid axis."""
    k = pl.program_id(2)

    @pl.when(k == 0)
    def _():
        acc_ref[...] = jnp.zeros_like(acc_ref)

    # x tile: (tm, tk), weight tile already in (K, N) layout: (tk, tn).
    acc_ref[...] += jnp.dot(x_ref[...], w_ref[...],
                            preferred_element_type=jnp.float32)

    @pl.when(k == pl.num_programs(2) - 1)
    def _():
        # Bias added exactly once, on the final K step (lane-dense (1, tn)).
        o_ref[...] = (acc_ref[...] + b_ref[...]).astype(o_ref.dtype)


def hacked_linear(x, weight_raw, bias, method=_identity_method,
                  *, tm=128, tn=128, tk=256):
    """y = x @ method(weight_raw).T + bias via a tiled Pallas matmul."""
    batch, in_features = x.shape
    out_features = weight_raw.shape[0]

    # _setweights(): recompute the effective weight from the raw parameter.
    # Done once per forward on the FULL weight so non-elementwise methods
    # (weight norm, spectral norm, ...) keep reference semantics, and so the
    # transform is not recomputed for every M tile inside the grid.
    w = method(weight_raw)            # (out_features, in_features)
    w_t = w.T                         # (in_features, out_features) -> (K, N)

    # Pad everything to tile multiples: lane-dense output, (8,128)-aligned
    # blocks, and an exact grid.  Zero padding along K contributes 0 to the
    # accumulation; padded M/N rows/cols are sliced off afterwards.
    m_p = _round_up(batch, tm)
    k_p = _round_up(in_features, tk)
    n_p = _round_up(out_features, tn)

    x_p = jnp.pad(x, ((0, m_p - batch), (0, k_p - in_features)))
    w_p = jnp.pad(w_t, ((0, k_p - in_features), (0, n_p - out_features)))
    b_p = jnp.pad(bias.reshape(1, out_features),
                  ((0, 0), (0, n_p - out_features)))

    grid = (m_p // tm, n_p // tn, k_p // tk)

    itemsize = jnp.dtype(x.dtype).itemsize
    cost = pl.CostEstimate(
        flops=2 * batch * out_features * in_features,
        transcendentals=0,
        bytes_accessed=(x_p.size + w_p.size + b_p.size + m_p * n_p) * itemsize,
    )

    out_p = pl.pallas_call(
        _tiled_linear_kernel,
        out_shape=jax.ShapeDtypeStruct((m_p, n_p), x.dtype),
        grid_spec=pltpu.PrefetchScalarGridSpec(
            num_scalar_prefetch=0,
            grid=grid,
            in_specs=[
                pl.BlockSpec((tm, tk), lambda i, j, k: (i, k)),   # x
                pl.BlockSpec((tk, tn), lambda i, j, k: (k, j)),   # W^T (K,N)
                pl.BlockSpec((1, tn), lambda i, j, k: (0, j)),    # bias
            ],
            out_specs=pl.BlockSpec((tm, tn), lambda i, j, k: (i, j)),
            scratch_shapes=[pltpu.VMEM((tm, tn), jnp.float32)],
        ),
        compiler_params=pltpu.CompilerParams(
            dimension_semantics=("parallel", "parallel", "arbitrary"),
            vmem_limit_bytes=64 << 20,
        ),
        cost_estimate=cost,
    )(x_p, w_p, b_p)

    return out_p[:batch, :out_features]


class WeightHacker:
    """JAX/Pallas port of the PyTorch WeightHacker wrapping an nn.Linear."""

    def __init__(self, weight_raw, bias, method=_identity_method,
                 *, tm=128, tn=128, tk=256):
        # Tile defaults target 128-aligned MXU tiles (works on v5e/v6e/v7x);
        # bump tm/tn to 256 and tk to 512+ for big bf16 shapes on v6e.
        self.weight_raw = weight_raw    # (out_features, in_features)
        self.bias = bias                # (out_features,)
        self.method = method
        self.tm, self.tn, self.tk = tm, tn, tk

    def __call__(self, x):
        return hacked_linear(x, self.weight_raw, self.bias, self.method,
                             tm=self.tm, tn=self.tn, tk=self.tk)


if __name__ == "__main__":
    # Small deterministic shapes: batch=8, hidden=32 (Linear(32, 32)).
    batch, hidden = 8, 32
    key = jax.random.PRNGKey(0)
    kx, kw, kb = jax.random.split(key, 3)

    x = jax.random.normal(kx, (batch, hidden), dtype=jnp.float32)
    weight_raw = jax.random.normal(kw, (hidden, hidden), dtype=jnp.float32) * 0.1
    bias = jax.random.normal(kb, (hidden,), dtype=jnp.float32) * 0.1

    hacker = WeightHacker(weight_raw, bias)
    out = hacker(x)
    out = jax.block_until_ready(out)

    # Reference check in plain JAX (same semantics as the PyTorch forward).
    ref = x @ _identity_method(weight_raw).T + bias
    assert out.shape == (batch, hidden)
    assert jnp.allclose(out, ref, atol=1e-5, rtol=1e-5)

    print("KERNEL_OK")
</pallas_src>

<mosaic_0001>
module attributes {stable_mosaic.version = 11 : i64} {
  func.func @_tiled_linear_kernel(%arg0: i32, %arg1: i32, %arg2: i32, %arg3: memref<128x256xf32, #tpu.memory_space<vmem>>, %arg4: memref<256x128xf32, #tpu.memory_space<vmem>>, %arg5: memref<1x128xf32, #tpu.memory_space<vmem>>, %arg6: memref<128x128xf32, #tpu.memory_space<vmem>>, %arg7: memref<128x128xf32, #tpu.memory_space<vmem>>) attributes {dimension_semantics = [#tpu.dimension_semantics<parallel>, #tpu.dimension_semantics<parallel>, #tpu.dimension_semantics<arbitrary>], iteration_bounds = array<i64: 1, 1, 1>, scalar_prefetch = 0 : i64, scratch_operands = 1 : i64, tpu.core_type = #tpu.core_type<tc>, window_params = [{transform_indices = @transform_0, window_bounds = array<i64: 128, 256>}, {transform_indices = @transform_1, window_bounds = array<i64: 256, 128>}, {transform_indices = @transform_2, window_bounds = array<i64: 1, 128>}, {transform_indices = @transform_3, window_bounds = array<i64: 128, 128>}]} {
    %c0_i32 = arith.constant 0 : i32
    %0 = arith.cmpi eq, %arg2, %c0_i32 : i32
    %1 = arith.extui %0 : i1 to i32
    %c0_i32_0 = arith.constant 0 : i32
    %2 = arith.cmpi ne, %1, %c0_i32_0 : i32
    scf.if %2 {
      %cst_10 = arith.constant 0.000000e+00 : f32
      %12 = vector.broadcast %cst_10 : f32 to vector<128x128xf32>
      %c0_11 = arith.constant 0 : index
      %c0_12 = arith.constant 0 : index
      %13 = vector.load %arg7[%c0_11, %c0_12] : memref<128x128xf32, #tpu.memory_space<vmem>>, vector<128x128xf32>
      tpu.vector_store %arg7[%c0_11, %c0_12], %12 {strides = array<i32>} : memref<128x128xf32, #tpu.memory_space<vmem>>, vector<128x128xf32>,
    } else {
    }
    %c0 = arith.constant 0 : index
    %c0_1 = arith.constant 0 : index
    %3 = vector.load %arg7[%c0, %c0_1] : memref<128x128xf32, #tpu.memory_space<vmem>>, vector<128x128xf32>
    %c0_2 = arith.constant 0 : index
    %c0_3 = arith.constant 0 : index
    %4 = vector.load %arg3[%c0_2, %c0_3] : memref<128x256xf32, #tpu.memory_space<vmem>>, vector<128x256xf32>
    %c0_4 = arith.constant 0 : index
    %c0_5 = arith.constant 0 : index
    %5 = vector.load %arg4[%c0_4, %c0_5] : memref<256x128xf32, #tpu.memory_space<vmem>>, vector<256x128xf32>
    %cst = arith.constant dense<0.000000e+00> : vector<128x128xf32>
    %6 = tpu.matmul %4, %5, %cst {dimension_numbers = #tpu.dot_dimension_numbers<[1], [0], [0], [1], [0, 0, 1, 1], [], []>} : vector<128x256xf32>, vector<256x128xf32>, vector<128x128xf32> -> vector<128x128xf32>
    %7 = arith.addf %3, %6 : vector<128x128xf32>
    %c0_6 = arith.constant 0 : index
    %c0_7 = arith.constant 0 : index
    %8 = vector.load %arg7[%c0_6, %c0_7] : memref<128x128xf32, #tpu.memory_space<vmem>>, vector<128x128xf32>
    tpu.vector_store %arg7[%c0_6, %c0_7], %7 {strides = array<i32>} : memref<128x128xf32, #tpu.memory_space<vmem>>, vector<128x128xf32>,
    %c0_i32_8 = arith.constant 0 : i32
    %9 = arith.cmpi eq, %arg2, %c0_i32_8 : i32
    %10 = arith.extui %9 : i1 to i32
    %c0_i32_9 = arith.constant 0 : i32
    %11 = arith.cmpi ne, %10, %c0_i32_9 : i32
    scf.if %11 {
      %c0_10 = arith.constant 0 : index
      %c0_11 = arith.constant 0 : index
      %12 = vector.load %arg7[%c0_10, %c0_11] : memref<128x128xf32, #tpu.memory_space<vmem>>, vector<128x128xf32>
      %c0_12 = arith.constant 0 : index
      %c0_13 = arith.constant 0 : index
      %13 = vector.load %arg5[%c0_12, %c0_13] : memref<1x128xf32, #tpu.memory_space<vmem>>, vector<1x128xf32>
      %14 = vector.broadcast %13 : vector<1x128xf32> to vector<128x128xf32>
      %15 = arith.addf %12, %14 : vector<128x128xf32>
      %c0_14 = arith.constant 0 : index
      %c0_15 = arith.constant 0 : index
      %16 = vector.load %arg6[%c0_14, %c0_15] : memref<128x128xf32, #tpu.memory_space<vmem>>, vector<128x128xf32>
      tpu.vector_store %arg6[%c0_14, %c0_15], %15 {strides = array<i32>} : memref<128x128xf32, #tpu.memory_space<vmem>>, vector<128x128xf32>,
    } else {
    }
    return
  }
  func.func @transform_0(%arg0: i32, %arg1: i32, %arg2: i32) -> (i32, i32) {
    %c0_i32 = arith.constant 0 : i32
    return %arg0, %arg2 : i32, i32
  }
  func.func @transform_1(%arg0: i32, %arg1: i32, %arg2: i32) -> (i32, i32) {
    %c0_i32 = arith.constant 0 : i32
    return %arg2, %arg1 : i32, i32
  }
  func.func @transform_2(%arg0: i32, %arg1: i32, %arg2: i32) -> (i32, i32) {
    %c0_i32 = arith.constant 0 : i32
    %c0_i32_0 = arith.constant 0 : i32
    return %c0_i32, %arg1 : i32, i32
  }
  func.func @transform_3(%arg0: i32, %arg1: i32, %arg2: i32) -> (i32, i32) {
    %c0_i32 = arith.constant 0 : i32
    return %arg0, %arg1 : i32, i32
  }
}

</mosaic_0001>

<llo_original>
// kernel: tpu_custom_call.1
$region0: #{tpu_custom_call.1}
  #allocation0 [shape = 'u32[]', space=smem, size = 0x4, offset = 0x4, fixed_abs, tag = 'smem constant byte address 0x4 - core index']
  #allocation1 [shape = 'u32[144,128]{1,0:T(1,128)}', space=vmem, size = 0x12000, scoped, tag = 'internal scratch']
  #allocation2 [shape = 'f32[128,128]{1,0:T(8,128)}', space=vmem, size = 0x10000, scoped, tag = 'scratch operand']
  %s0 = inlined_call_operand.hbm [shape: f32[128,256], index: 0, kind: input, shape index: {}]
  %s1 = inlined_call_operand.hbm [shape: f32[256,128], index: 1, kind: input, shape index: {}]
  %s2 = inlined_call_operand.vmem [shape: f32[1,128], index: 2, kind: input, shape index: {}]
  %s3 = inlined_call_operand.hbm [shape: f32[128,128], index: 3, kind: output, shape index: {}]
  %s4 = sld [smem:[#allocation0]]
  $region38: #{tpu_custom_call.1} parent=0
    _
  %s6 = ssub.s32 1, %s4
  %s7 = scalar_select 0, %s6, %s4
  $region1: #{tpu_custom_call.1} parent=0
    #allocation3 [shape = 'u8[131072]{0}', space=vmem, size = 0x20000, scoped, tag = 'input window, operand 0, single buffered']
    #allocation4 [shape = 's32[1]{0}', space=sflag, size = 0x4, scoped, tag = 'scoped memory for tpu_custom_call.1']
    #allocation5 [shape = 's32[1]{0}', space=sflag, size = 0x4, scoped, tag = 'scoped memory for tpu_custom_call.1']
    #allocation6 [shape = 'u8[131072]{0}', space=vmem, size = 0x20000, scoped, tag = 'input window, operand 1, single buffered']
    #allocation7 [shape = 's32[1]{0}', space=sflag, size = 0x4, scoped, tag = 'scoped memory for tpu_custom_call.1']
    #allocation8 [shape = 'u8[65536]{0}', space=vmem, size = 0x10000, scoped, tag = 'output window, operand 0, single buffered']
    %8 = vsyncpa [#allocation4], 0
    %9 = vsyncpa [#allocation7], 0
    %10 = vsyncpa [#allocation5], 0
    // Predicated region
    $region2: #{tpu_custom_call.1} parent=1 // pred_check
      _
    $region3: #{tpu_custom_call.1} parent=1 // pred_check_branch
      %12 = sbr.rel (0) target = $region5
    $region4: #{tpu_custom_call.1} parent=1 // pred_region
      %s14 = ssub.s32 4096, 4096
      %15 = vsyncadd [#allocation4], %s14
      %s16 = sshll.u32 [#allocation3], 4
      %s17 = int_to_ptr.vmem [resolvable:$true] %s16
      %22 = dma.hbm_to_vmem [thread:$0]  %s0, 4096, %s17, [#allocation4], 256, 256, 16
    $region5: #{tpu_custom_call.1} parent=1 // pred_fallthru
      _
    // Predicated region
    $region6: #{tpu_custom_call.1} parent=1 // pred_check
      _
    $region7: #{tpu_custom_call.1} parent=1 // pred_check_branch
      %24 = sbr.rel (0) target = $region9
    $region8: #{tpu_custom_call.1} parent=1 // pred_region
      %s26 = ssub.s32 4096, 4096
      %27 = vsyncadd [#allocation7], %s26
      %s28 = sshll.u32 [#allocation6], 4
      %s29 = int_to_ptr.vmem [resolvable:$true] %s28
      %34 = dma.hbm_to_vmem [thread:$0]  %s1, 4096, %s29, [#allocation7], 128, 128, 8
    $region9: #{tpu_custom_call.1} parent=1 // pred_fallthru
      _
    // Predicated region
    $region10: #{tpu_custom_call.1} parent=1 // pred_check
      _
    $region11: #{tpu_custom_call.1} parent=1 // pred_check_branch
      %36 = sbr.rel (0) target = $region13
    $region12: #{tpu_custom_call.1} parent=1 // pred_region
      _
    $region13: #{tpu_custom_call.1} parent=1 // pred_fallthru
      _
    // Predicated region
    $region14: #{tpu_custom_call.1} parent=1 // pred_check
      _
    $region15: #{tpu_custom_call.1} parent=1 // pred_check_branch
      %38 = sbr.rel (0) target = $region17
    $region16: #{tpu_custom_call.1} parent=1 // pred_region
      %39 = dma.done [#allocation4], 4096
    $region17: #{tpu_custom_call.1} parent=1 // pred_fallthru
      _
    // Predicated region
    $region18: #{tpu_custom_call.1} parent=1 // pred_check
      _
    $region19: #{tpu_custom_call.1} parent=1 // pred_check_branch
      %41 = sbr.rel (0) target = $region21
    $region20: #{tpu_custom_call.1} parent=1 // pred_region
      %42 = dma.done [#allocation7], 4096
    $region21: #{tpu_custom_call.1} parent=1 // pred_fallthru
      _
    %p43 = scmp.eq.s32.totalorder 0, 0
    // Predicated region
    $region22: #{tpu_custom_call.1} parent=1 // pred_check
      %p44 = pneg %p43
    $region23: #{tpu_custom_call.1} parent=1 // pred_check_branch
      %46 = sbr.rel (%p44) target = $region25
    $region24: #{tpu_custom_call.1} parent=1 // pred_region
      %47 = vst [vmem:[#allocation2] sm:$0xff] 0.0
      %48 = vst [vmem:[#allocation2 + $0x8] sm:$0xff] 0.0
      %49 = vst [vmem:[#allocation2 + $0x10] sm:$0xff] 0.0
      %50 = vst [vmem:[#allocation2 + $0x18] sm:$0xff] 0.0
      %51 = vst [vmem:[#allocation2 + $0x20] sm:$0xff] 0.0
      %52 = vst [vmem:[#allocation2 + $0x28] sm:$0xff] 0.0
      %53 = vst [vmem:[#allocation2 + $0x30] sm:$0xff] 0.0
      %54 = vst [vmem:[#allocation2 + $0x38] sm:$0xff] 0.0
      %55 = vst [vmem:[#allocation2 + $0x40] sm:$0xff] 0.0
      %56 = vst [vmem:[#allocation2 + $0x48] sm:$0xff] 0.0
      %57 = vst [vmem:[#allocation2 + $0x50] sm:$0xff] 0.0
      %58 = vst [vmem:[#allocation2 + $0x58] sm:$0xff] 0.0
      %59 = vst [vmem:[#allocation2 + $0x60] sm:$0xff] 0.0
      %60 = vst [vmem:[#allocation2 + $0x68] sm:$0xff] 0.0
      %61 = vst [vmem:[#allocation2 + $0x70] sm:$0xff] 0.0
      %62 = vst [vmem:[#allocation2 + $0x78] sm:$0xff] 0.0
    $region25: #{tpu_custom_call.1} parent=1 // pred_fallthru
      _
    %v63 = vld [vmem:[#allocation2] sm:$0xff]
    %v64 = vld [vmem:[#allocation2 + $0x8] sm:$0xff]
    %v65 = vld [vmem:[#allocation2 + $0x10] sm:$0xff]
    %v66 = vld [vmem:[#allocation2 + $0x18] sm:$0xff]
    %v67 = vld [vmem:[#allocation2 + $0x20] sm:$0xff]
    %v68 = vld [vmem:[#allocation2 + $0x28] sm:$0xff]
    %v69 = vld [vmem:[#allocation2 + $0x30] sm:$0xff]
    %v70 = vld [vmem:[#allocation2 + $0x38] sm:$0xff]
    %v71 = vld [vmem:[#allocation2 + $0x40] sm:$0xff]
    %v72 = vld [vmem:[#allocation2 + $0x48] sm:$0xff]
    %v73 = vld [vmem:[#allocation2 + $0x50] sm:$0xff]
    %v74 = vld [vmem:[#allocation2 + $0x58] sm:$0xff]
    %v75 = vld [vmem:[#allocation2 + $0x60] sm:$0xff]
    %v76 = vld [vmem:[#allocation2 + $0x68] sm:$0xff]
    %v77 = vld [vmem:[#allocation2 + $0x70] sm:$0xff]
    %v78 = vld [vmem:[#allocation2 + $0x78] sm:$0xff]
    %v79 = vld [vmem:[#allocation3] sm:$0xff]
    %v80 = vld [vmem:[#allocation3 + $0x8] sm:$0xff]
    %v81 = vld [vmem:[#allocation3 + $0x10] sm:$0xff]
    %v82 = vld [vmem:[#allocation3 + $0x18] sm:$0xff]
    %v83 = vld [vmem:[#allocation3 + $0x20] sm:$0xff]
    %v84 = vld [vmem:[#allocation3 + $0x28] sm:$0xff]
    %v85 = vld [vmem:[#allocation3 + $0x30] sm:$0xff]
    %v86 = vld [vmem:[#allocation3 + $0x38] sm:$0xff]
    %v87 = vld [vmem:[#allocation3 + $0x40] sm:$0xff]
    %v88 = vld [vmem:[#allocation3 + $0x48] sm:$0xff]
    %v89 = vld [vmem:[#allocation3 + $0x50] sm:$0xff]
    %v90 = vld [vmem:[#allocation3 + $0x58] sm:$0xff]
    %v91 = vld [vmem:[#allocation3 + $0x60] sm:$0xff]
    %v92 = vld [vmem:[#allocation3 + $0x68] sm:$0xff]
    %v93 = vld [vmem:[#allocation3 + $0x70] sm:$0xff]
    %v94 = vld [vmem:[#allocation3 + $0x78] sm:$0xff]
    %v95 = vld [vmem:[#allocation3 + $0x80] sm:$0xff]
    %v96 = vld [vmem:[#allocation3 + $0x88] sm:$0xff]
    %v97 = vld [vmem:[#allocation3 + $0x90] sm:$0xff]
    %v98 = vld [vmem:[#allocation3 + $0x98] sm:$0xff]
    %v99 = vld [vmem:[#allocation3 + $0xa0] sm:$0xff]
    %v100 = vld [vmem:[#allocation3 + $0xa8] sm:$0xff]
    %v101 = vld [vmem:[#allocation3 + $0xb0] sm:$0xff]
    %v102 = vld [vmem:[#allocation3 + $0xb8] sm:$0xff]
    %v103 = vld [vmem:[#allocation3 + $0xc0] sm:$0xff]
    %v104 = vld [vmem:[#allocation3 + $0xc8] sm:$0xff]
    %v105 = vld [vmem:[#allocation3 + $0xd0] sm:$0xff]
    %v106 = vld [vmem:[#allocation3 + $0xd8] sm:$0xff]
    %v107 = vld [vmem:[#allocation3 + $0xe0] sm:$0xff]
    %v108 = vld [vmem:[#allocation3 + $0xe8] sm:$0xff]
    %v109 = vld [vmem:[#allocation3 + $0xf0] sm:$0xff]
    %v110 = vld [vmem:[#allocation3 + $0xf8] sm:$0xff]
    %v111 = vld [vmem:[#allocation6] sm:$0xff]
    %v112 = vld [vmem:[#allocation6 + $0x8] sm:$0xff]
    %v113 = vld [vmem:[#allocation6 + $0x10] sm:$0xff]
    %v114 = vld [vmem:[#allocation6 + $0x18] sm:$0xff]
    %v115 = vld [vmem:[#allocation6 + $0x20] sm:$0xff]
    %v116 = vld [vmem:[#allocation6 + $0x28] sm:$0xff]
    %v117 = vld [vmem:[#allocation6 + $0x30] sm:$0xff]
    %v118 = vld [vmem:[#allocation6 + $0x38] sm:$0xff]
    %v119 = vld [vmem:[#allocation6 + $0x40] sm:$0xff]
    %v120 = vld [vmem:[#allocation6 + $0x48] sm:$0xff]
    %v121 = vld [vmem:[#allocation6 + $0x50] sm:$0xff]
    %v122 = vld [vmem:[#allocation6 + $0x58] sm:$0xff]
    %v123 = vld [vmem:[#allocation6 + $0x60] sm:$0xff]
    %v124 = vld [vmem:[#allocation6 + $0x68] sm:$0xff]
    %v125 = vld [vmem:[#allocation6 + $0x70] sm:$0xff]
    %v126 = vld [vmem:[#allocation6 + $0x78] sm:$0xff]
    %v127 = vld [vmem:[#allocation6 + $0x80] sm:$0xff]
    %v128 = vld [vmem:[#allocation6 + $0x88] sm:$0xff]
    %v129 = vld [vmem:[#allocation6 + $0x90] sm:$0xff]
    %v130 = vld [vmem:[#allocation6 + $0x98] sm:$0xff]
    %v131 = vld [vmem:[#allocation6 + $0xa0] sm:$0xff]
    %v132 = vld [vmem:[#allocation6 + $0xa8] sm:$0xff]
    %v133 = vld [vmem:[#allocation6 + $0xb0] sm:$0xff]
    %v134 = vld [vmem:[#allocation6 + $0xb8] sm:$0xff]
    %v135 = vld [vmem:[#allocation6 + $0xc0] sm:$0xff]
    %v136 = vld [vmem:[#allocation6 + $0xc8] sm:$0xff]
    %v137 = vld [vmem:[#allocation6 + $0xd0] sm:$0xff]
    %v138 = vld [vmem:[#allocation6 + $0xd8] sm:$0xff]
    %v139 = vld [vmem:[#allocation6 + $0xe0] sm:$0xff]
    %v140 = vld [vmem:[#allocation6 + $0xe8] sm:$0xff]
    %v141 = vld [vmem:[#allocation6 + $0xf0] sm:$0xff]
    %v142 = vld [vmem:[#allocation6 + $0xf8] sm:$0xff]
    %143 = vmatprep.subr.mxu0 0.0
    %144 = vmatpush1.msra.mxu0 %v126
    %145 = vmatprep.subr.mxu0 0.0
    %146 = vmatpush1.msra.mxu0 %v125
    %147 = vmatprep.subr.mxu0 0.0
    %148 = vmatpush1.msra.mxu0 %v124
    %149 = vmatprep.subr.mxu0 0.0
    %150 = vmatpush1.msra.mxu0 %v123
    %151 = vmatprep.subr.mxu0 0.0
    %152 = vmatpush1.msra.mxu0 %v122
    %153 = vmatprep.subr.mxu0 0.0
    %154 = vmatpush1.msra.mxu0 %v121
    %155 = vmatprep.subr.mxu0 0.0
    %156 = vmatpush1.msra.mxu0 %v120
    %157 = vmatprep.subr.mxu0 0.0
    %158 = vmatpush1.msra.mxu0 %v119
    %159 = vmatprep.subr.mxu0 0.0
    %160 = vmatpush1.msra.mxu0 %v118
    %161 = vmatprep.subr.mxu0 0.0
    %162 = vmatpush1.msra.mxu0 %v117
    %163 = vmatprep.subr.mxu0 0.0
    %164 = vmatpush1.msra.mxu0 %v116
    %165 = vmatprep.subr.mxu0 0.0
    %166 = vmatpush1.msra.mxu0 %v115
    %167 = vmatprep.subr.mxu0 0.0
    %168 = vmatpush1.msra.mxu0 %v114
    %169 = vmatprep.subr.mxu0 0.0
    %170 = vmatpush1.msra.mxu0 %v113
    %171 = vmatprep.subr.mxu0 0.0
    %172 = vmatpush1.msra.mxu0 %v112
    %173 = vmatprep.subr.mxu0 0.0
    %174 = vmatpush1.msra.mxu0 %v111
    %175 = vmatprep.subr.mxu0 0.0
    %176 = vmatpush2.msra.mxu0 %v142
    %177 = vmatprep.subr.mxu0 0.0
    %178 = vmatpush2.msra.mxu0 %v141
    %179 = vmatprep.subr.mxu0 0.0
    %180 = vmatpush2.msra.mxu0 %v140
    %181 = vmatprep.subr.mxu0 0.0
    %182 = vmatpush2.msra.mxu0 %v139
    %183 = vmatprep.subr.mxu0 0.0
    %184 = vmatpush2.msra.mxu0 %v138
    %185 = vmatprep.subr.mxu0 0.0
    %186 = vmatpush2.msra.mxu0 %v137
    %187 = vmatprep.subr.mxu0 0.0
    %188 = vmatpush2.msra.mxu0 %v136
    %189 = vmatprep.subr.mxu0 0.0
    %190 = vmatpush2.msra.mxu0 %v135
    %191 = vmatprep.subr.mxu0 0.0
    %192 = vmatpush2.msra.mxu0 %v134
    %193 = vmatprep.subr.mxu0 0.0
    %194 = vmatpush2.msra.mxu0 %v133
    %195 = vmatprep.subr.mxu0 0.0
    %196 = vmatpush2.msra.mxu0 %v132
    %197 = vmatprep.subr.mxu0 0.0
    %198 = vmatpush2.msra.mxu0 %v131
    %199 = vmatprep.subr.mxu0 0.0
    %200 = vmatpush2.msra.mxu0 %v130
    %201 = vmatprep.subr.mxu0 0.0
    %202 = vmatpush2.msra.mxu0 %v129
    %203 = vmatprep.subr.mxu0 0.0
    %204 = vmatpush2.msra.mxu0 %v128
    %205 = vmatprep.subr.mxu0 0.0
    %206 = vmatpush2.msra.mxu0 %v127
    %207 = vmatprep.mubr.f32.mxu0 %v80
    %208 = vmatmul.mubr.f32.gmra.mxu0 %v79
    %v209 = vpop.f32.mrf.mxu0
    %v210 = vadd.f32 0.0, %v209
    %v211 = vpop.f32.mrf.mxu0
    %212 = vmatprep.mubr.f32.mxu0 %v82
    %213 = vmatmul.mubr.f32.gmra.mxu0 %v81
    %v214 = vpop.f32.mrf.mxu0
    %v215 = vadd.f32 0.0, %v214
    %v216 = vpop.f32.mrf.mxu0
    %217 = vmatprep.mubr.f32.mxu0 %v84
    %218 = vmatmul.mubr.f32.gmra.mxu0 %v83
    %v219 = vpop.f32.mrf.mxu0
    %v220 = vadd.f32 0.0, %v219
    %v221 = vpop.f32.mrf.mxu0
    %222 = vmatprep.mubr.f32.mxu0 %v86
    %223 = vmatmul.mubr.f32.gmra.mxu0 %v85
    %v224 = vpop.f32.mrf.mxu0
    %v225 = vadd.f32 0.0, %v224
    %v226 = vpop.f32.mrf.mxu0
    %227 = vmatprep.mubr.f32.mxu0 %v88
    %228 = vmatmul.mubr.f32.gmra.mxu0 %v87
    %v229 = vpop.f32.mrf.mxu0
    %v230 = vadd.f32 0.0, %v229
    %v231 = vpop.f32.mrf.mxu0
    %232 = vmatprep.mubr.f32.mxu0 %v90
    %233 = vmatmul.mubr.f32.gmra.mxu0 %v89
    %v234 = vpop.f32.mrf.mxu0
    %v235 = vadd.f32 0.0, %v234
    %v236 = vpop.f32.mrf.mxu0
    %237 = vmatprep.mubr.f32.mxu0 %v92
    %238 = vmatmul.mubr.f32.gmra.mxu0 %v91
    %v239 = vpop.f32.mrf.mxu0
    %v240 = vadd.f32 0.0, %v239
    %v241 = vpop.f32.mrf.mxu0
    %242 = vmatprep.mubr.f32.mxu0 %v94
    %243 = vmatmul.mubr.f32.gmra.mxu0 %v93
    %v244 = vpop.f32.mrf.mxu0
    %v245 = vadd.f32 0.0, %v244
    %v246 = vpop.f32.mrf.mxu0
    %247 = vmatprep.mubr.f32.mxu0 %v96
    %248 = vmatmul.mubr.f32.gmra.mxu0 %v95
    %v249 = vpop.f32.mrf.mxu0
    %v250 = vadd.f32 0.0, %v249
    %v251 = vpop.f32.mrf.mxu0
    %252 = vmatprep.mubr.f32.mxu0 %v98
    %253 = vmatmul.mubr.f32.gmra.mxu0 %v97
    %v254 = vpop.f32.mrf.mxu0
    %v255 = vadd.f32 0.0, %v254
    %v256 = vpop.f32.mrf.mxu0
    %257 = vmatprep.mubr.f32.mxu0 %v100
    %258 = vmatmul.mubr.f32.gmra.mxu0 %v99
    %v259 = vpop.f32.mrf.mxu0
    %v260 = vadd.f32 0.0, %v259
    %v261 = vpop.f32.mrf.mxu0
    %262 = vmatprep.mubr.f32.mxu0 %v102
    %263 = vmatmul.mubr.f32.gmra.mxu0 %v101
    %v264 = vpop.f32.mrf.mxu0
    %v265 = vadd.f32 0.0, %v264
    %v266 = vpop.f32.mrf.mxu0
    %267 = vmatprep.mubr.f32.mxu0 %v104
    %268 = vmatmul.mubr.f32.gmra.mxu0 %v103
    %v269 = vpop.f32.mrf.mxu0
    %v270 = vadd.f32 0.0, %v269
    %v271 = vpop.f32.mrf.mxu0
    %272 = vmatprep.mubr.f32.mxu0 %v106
    %273 = vmatmul.mubr.f32.gmra.mxu0 %v105
    %v274 = vpop.f32.mrf.mxu0
    %v275 = vadd.f32 0.0, %v274
    %v276 = vpop.f32.mrf.mxu0
    %277 = vmatprep.mubr.f32.mxu0 %v108
    %278 = vmatmul.mubr.f32.gmra.mxu0 %v107
    %v279 = vpop.f32.mrf.mxu0
    %v280 = vadd.f32 0.0, %v279
    %v281 = vpop.f32.mrf.mxu0
    %282 = vmatprep.mubr.f32.mxu0 %v110
    %283 = vmatmul.mubr.f32.gmra.mxu0 %v109
    %v284 = vpop.f32.mrf.mxu0
    %v285 = vadd.f32 0.0, %v284
    %v286 = vpop.f32.mrf.mxu0
    %287 = vdwg.mxu0
    %v288 = vadd.f32 %v63, %v210
    %v289 = vadd.f32 %v64, %v215
    %v290 = vadd.f32 %v65, %v220
    %v291 = vadd.f32 %v66, %v225
    %v292 = vadd.f32 %v67, %v230
    %v293 = vadd.f32 %v68, %v235
    %v294 = vadd.f32 %v69, %v240
    %v295 = vadd.f32 %v70, %v245
    %v296 = vadd.f32 %v71, %v250
    %v297 = vadd.f32 %v72, %v255
    %v298 = vadd.f32 %v73, %v260
    %v299 = vadd.f32 %v74, %v265
    %v300 = vadd.f32 %v75, %v270
    %v301 = vadd.f32 %v76, %v275
    %v302 = vadd.f32 %v77, %v280
    %v303 = vadd.f32 %v78, %v285
    %304 = vst [vmem:[#allocation2] sm:$0xff] %v288
    %305 = vst [vmem:[#allocation2 + $0x8] sm:$0xff] %v289
    %306 = vst [vmem:[#allocation2 + $0x10] sm:$0xff] %v290
    %307 = vst [vmem:[#allocation2 + $0x18] sm:$0xff] %v291
    %308 = vst [vmem:[#allocation2 + $0x20] sm:$0xff] %v292
    %309 = vst [vmem:[#allocation2 + $0x28] sm:$0xff] %v293
    %310 = vst [vmem:[#allocation2 + $0x30] sm:$0xff] %v294
    %311 = vst [vmem:[#allocation2 + $0x38] sm:$0xff] %v295
    %312 = vst [vmem:[#allocation2 + $0x40] sm:$0xff] %v296
    %313 = vst [vmem:[#allocation2 + $0x48] sm:$0xff] %v297
    %314 = vst [vmem:[#allocation2 + $0x50] sm:$0xff] %v298
    %315 = vst [vmem:[#allocation2 + $0x58] sm:$0xff] %v299
    %316 = vst [vmem:[#allocation2 + $0x60] sm:$0xff] %v300
    %317 = vst [vmem:[#allocation2 + $0x68] sm:$0xff] %v301
    %318 = vst [vmem:[#allocation2 + $0x70] sm:$0xff] %v302
    %319 = vst [vmem:[#allocation2 + $0x78] sm:$0xff] %v303
    // Predicated region
    $region26: #{tpu_custom_call.1} parent=1 // pred_check
      %p320 = pneg %p43
    $region27: #{tpu_custom_call.1} parent=1 // pred_check_branch
      %322 = sbr.rel (%p320) target = $region29
    $region28: #{tpu_custom_call.1} parent=1 // pred_region
      %v323 = vld [vmem:[#allocation2] sm:$0xff]
      %v324 = vld [vmem:[#allocation2 + $0x8] sm:$0xff]
      %v325 = vld [vmem:[#allocation2 + $0x10] sm:$0xff]
      %v326 = vld [vmem:[#allocation2 + $0x18] sm:$0xff]
      %v327 = vld [vmem:[#allocation2 + $0x20] sm:$0xff]
      %v328 = vld [vmem:[#allocation2 + $0x28] sm:$0xff]
      %v329 = vld [vmem:[#allocation2 + $0x30] sm:$0xff]
      %v330 = vld [vmem:[#allocation2 + $0x38] sm:$0xff]
      %v331 = vld [vmem:[#allocation2 + $0x40] sm:$0xff]
      %v332 = vld [vmem:[#allocation2 + $0x48] sm:$0xff]
      %v333 = vld [vmem:[#allocation2 + $0x50] sm:$0xff]
      %v334 = vld [vmem:[#allocation2 + $0x58] sm:$0xff]
      %v335 = vld [vmem:[#allocation2 + $0x60] sm:$0xff]
      %v336 = vld [vmem:[#allocation2 + $0x68] sm:$0xff]
      %v337 = vld [vmem:[#allocation2 + $0x70] sm:$0xff]
      %v338 = vld [vmem:[#allocation2 + $0x78] sm:$0xff]
      %v339 = vld [vmem:[%s2] sm:$0x1]
      %v341 = vlaneseq
      %v342 = vshrl.u32 %v341, 7
      %v343 = vsub.s32 0, %v342
      %v344 = vrot.slane %v339, %v343
      %v346 = vadd.f32 %v323, %v344
      %v347 = vadd.f32 %v324, %v344
      %v348 = vadd.f32 %v325, %v344
      %v349 = vadd.f32 %v326, %v344
      %v350 = vadd.f32 %v327, %v344
      %v351 = vadd.f32 %v328, %v344
      %v352 = vadd.f32 %v329, %v344
      %v353 = vadd.f32 %v330, %v344
      %v354 = vadd.f32 %v331, %v344
      %v355 = vadd.f32 %v332, %v344
      %v356 = vadd.f32 %v333, %v344
      %v357 = vadd.f32 %v334, %v344
      %v358 = vadd.f32 %v335, %v344
      %v359 = vadd.f32 %v336, %v344
      %v360 = vadd.f32 %v337, %v344
      %v361 = vadd.f32 %v338, %v344
      %362 = vst [vmem:[#allocation8] sm:$0xff] %v346
      %363 = vst [vmem:[#allocation8 + $0x8] sm:$0xff] %v347
      %364 = vst [vmem:[#allocation8 + $0x10] sm:$0xff] %v348
      %365 = vst [vmem:[#allocation8 + $0x18] sm:$0xff] %v349
      %366 = vst [vmem:[#allocation8 + $0x20] sm:$0xff] %v350
      %367 = vst [vmem:[#allocation8 + $0x28] sm:$0xff] %v351
      %368 = vst [vmem:[#allocation8 + $0x30] sm:$0xff] %v352
      %369 = vst [vmem:[#allocation8 + $0x38] sm:$0xff] %v353
      %370 = vst [vmem:[#allocation8 + $0x40] sm:$0xff] %v354
      %371 = vst [vmem:[#allocation8 + $0x48] sm:$0xff] %v355
      %372 = vst [vmem:[#allocation8 + $0x50] sm:$0xff] %v356
      %373 = vst [vmem:[#allocation8 + $0x58] sm:$0xff] %v357
      %374 = vst [vmem:[#allocation8 + $0x60] sm:$0xff] %v358
      %375 = vst [vmem:[#allocation8 + $0x68] sm:$0xff] %v359
      %376 = vst [vmem:[#allocation8 + $0x70] sm:$0xff] %v360
      %377 = vst [vmem:[#allocation8 + $0x78] sm:$0xff] %v361
    $region29: #{tpu_custom_call.1} parent=1 // pred_fallthru
      _
    // Predicated region
    $region30: #{tpu_custom_call.1} parent=1 // pred_check
      _
    $region31: #{tpu_custom_call.1} parent=1 // pred_check_branch
      %379 = sbr.rel (0) target = $region33
    $region32: #{tpu_custom_call.1} parent=1 // pred_region
      %s381 = ssub.s32 2048, 2048
      %382 = vsyncadd [#allocation5], %s381
      %s383 = sshll.u32 [#allocation8], 4
      %s384 = int_to_ptr.vmem [resolvable:$true] %s383
      %389 = dma.vmem_to_hbm [thread:$0]  %s384, 2048, %s3, [#allocation5], 128, 128, 8
    $region33: #{tpu_custom_call.1} parent=1 // pred_fallthru
      _
    // Predicated region
    $region34: #{tpu_custom_call.1} parent=1 // pred_check
      _
    $region35: #{tpu_custom_call.1} parent=1 // pred_check_branch
      %391 = sbr.rel (0) target = $region37
    $region36: #{tpu_custom_call.1} parent=1 // pred_region
      %392 = dma.done [#allocation5], 2048
    $region37: #{tpu_custom_call.1} parent=1 // pred_fallthru
      _
    %393 = vsyncpa [#allocation4], 1
    %394 = vsyncpa [#allocation7], 1
    %395 = vsyncpa [#allocation5], 1

</llo_original>
